<compile_context>
chip_gen: v7x
topology: tpu7x:2x2x1
jax: 0.10.0
libtpu: 0.0.40
codegen_flags: <defaults>
</compile_context>

<pallas_src>
import math

import jax
import jax.numpy as jnp
from jax import lax
from jax.experimental import pallas as pl
from jax.experimental.pallas import tpu as pltpu


def _make_kernel(DF, tR, D, k):
    """Builds the kernel closure.

    DF = folded feature width (k * D), tR = rows per S-tile (folded rows),
    D  = original d_model, k = fold factor (1 if no folding).
    """
    neg_log = -math.log(10000.0) / D
    log2_d = D.bit_length() - 1  # only used when k > 1 (then D is a power of 2)

    def kernel(coords_ref, x_ref, o_ref, pe_ref, row_ref):
        # coords_ref : SMEM [2*B] f32   (lat0, lon0, lat1, lon1, ...)
        # x_ref/o_ref: VMEM [tR, DF]    (batch dim squeezed by BlockSpec)
        # pe_ref     : VMEM [tR, DF]    batch-invariant time PE for this S-tile
        # row_ref    : VMEM [3, DF]     lat-scale / lon-scale / cos-lane-mask rows
        i = pl.program_id(0)  # S-tile index (outer, "parallel")
        b = pl.program_id(1)  # batch index  (inner, "arbitrary")

        @pl.when(b == 0)
        def _fill_tile_invariants():
            f = lax.broadcasted_iota(jnp.int32, (tR, DF), 1)    # folded feature idx
            row = lax.broadcasted_iota(jnp.int32, (tR, DF), 0)  # row within tile
            if k == 1:
                d = f
                pos = (i * tR + row).astype(jnp.float32)
            else:
                d = f & (D - 1)
                pos = ((i * tR + row) * k + (f >> log2_d)).astype(jnp.float32)
            r = d & 3
            div = jnp.exp((d - r).astype(jnp.float32) * neg_log)
            arg = pos * div
            # time PE: sin on r==0 lanes, cos on r==1 lanes, 0 on lat/lon lanes.
            pe_ref[...] = jnp.where(
                r == 0, jnp.sin(arg), jnp.where(r == 1, jnp.cos(arg), 0.0)
            )

            # Per-feature rows for the per-batch lat/lon encoding.
            f1 = lax.broadcasted_iota(jnp.int32, (1, DF), 1)
            d1 = f1 if k == 1 else (f1 & (D - 1))
            r1 = d1 & 3
            div1 = jnp.exp((d1 - r1).astype(jnp.float32) * neg_log)
            row_ref[0:1, :] = jnp.where(r1 == 2, div1, 0.0)  # scales lat
            row_ref[1:2, :] = jnp.where(r1 == 3, div1, 0.0)  # scales lon
            row_ref[2:3, :] = jnp.where(r1 == 3, 1.0, 0.0)   # cos-lane mask

        lat = coords_ref[2 * b] * (math.pi / 180.0)
        lon = coords_ref[2 * b + 1] * (math.pi / 180.0)
        # sin(lat*div) on r==2 lanes, cos(lon*div) on r==3 lanes, 0 elsewhere.
        latlon = (
            jnp.sin(lat * row_ref[0:1, :])
            + row_ref[2:3, :] * jnp.cos(lon * row_ref[1:2, :])
        )
        o_ref[...] = (
            x_ref[...].astype(jnp.float32) + pe_ref[...] + latlon
        ).astype(o_ref.dtype)

    return kernel


def wf_positional_encoding(token_embedding, coords):
    """token_embedding: [B, S, D], coords: [B, 2] (lat, lon degrees)."""
    B, S, D = token_embedding.shape
    assert D % 4 == 0, "d_model must be divisible by 4"
    dtype = token_embedding.dtype
    coords_flat = coords.astype(jnp.float32).reshape(-1)  # [2*B] for SMEM

    # Fold small D into a lane-dense 128-wide last dim when cleanly possible.
    if D < 128 and 128 % D == 0 and S % (128 // D) == 0:
        k = 128 // D
    else:
        k = 1
    SR, DF = S // k, D * k
    x = token_embedding.reshape(B, SR, DF)

    # Row tile: ~2 MiB per buffer, multiple of 8 rows (or the whole folded S).
    tile_bytes = 2 << 20
    rows = max(8, ((tile_bytes // (DF * 4)) // 8) * 8)
    tR = SR if SR <= rows else rows
    num_tiles = -(-SR // tR)

    # double-buffered in + out (4x) + pe scratch (1x) + slack
    vmem_need = 5 * tR * DF * 4 + (1 << 20)
    vmem_limit = int(min(48 << 20, max(32 << 20, vmem_need)))

    kernel = _make_kernel(DF=DF, tR=tR, D=D, k=k)

    out = pl.pallas_call(
        kernel,
        out_shape=jax.ShapeDtypeStruct((B, SR, DF), dtype),
        grid_spec=pltpu.PrefetchScalarGridSpec(
            num_scalar_prefetch=0,
            grid=(num_tiles, B),
            in_specs=[
                pl.BlockSpec(memory_space=pltpu.MemorySpace.SMEM),      # coords [2B]
                pl.BlockSpec((None, tR, DF), lambda i, b: (b, i, 0)),   # x tile
            ],
            out_specs=pl.BlockSpec((None, tR, DF), lambda i, b: (b, i, 0)),
            scratch_shapes=[
                pltpu.VMEM((tR, DF), jnp.float32),  # time PE for this S-tile
                pltpu.VMEM((3, DF), jnp.float32),   # lat/lon scale + mask rows
            ],
        ),
        compiler_params=pltpu.CompilerParams(
            dimension_semantics=("parallel", "arbitrary"),
            vmem_limit_bytes=vmem_limit,
        ),
    )(coords_flat, x)
    return out.reshape(B, S, D)


def _reference(token_embedding, coords):
    """Pure-JAX reference mirroring the PyTorch forward (positions 0..S-1)."""
    B, S, D = token_embedding.shape
    position = jnp.arange(S, dtype=jnp.float32)[:, None]                      # [S, 1]
    div_term = jnp.exp(
        jnp.arange(0, D, 4, dtype=jnp.float32) * (-math.log(10000.0) / D)
    )                                                                         # [D/4]
    lat = coords[:, :1] / 180.0 * math.pi
    lon = coords[:, 1:] / 180.0 * math.pi
    pe = jnp.zeros((B, S, D), jnp.float32)
    pe = pe.at[:, :, 2::4].set(jnp.sin(lat * div_term)[:, None, :])
    pe = pe.at[:, :, 3::4].set(jnp.cos(lon * div_term)[:, None, :])
    time_freq = (position * div_term)[None]                                   # [1, S, D/4]
    pe = pe.at[:, :, 0::4].set(jnp.sin(time_freq))
    pe = pe.at[:, :, 1::4].set(jnp.cos(time_freq))
    return token_embedding + pe


if __name__ == "__main__":
    key = jax.random.PRNGKey(0)

    def run_case(B, S, D, subkey):
        k1, k2, k3 = jax.random.split(subkey, 3)
        x = jax.random.normal(k1, (B, S, D), dtype=jnp.float32)
        coords = jnp.stack(
            [
                jax.random.uniform(k2, (B,), minval=-90.0, maxval=90.0),
                jax.random.uniform(k3, (B,), minval=-180.0, maxval=180.0),
            ],
            axis=1,
        ).astype(jnp.float32)
        out = jax.block_until_ready(wf_positional_encoding(x, coords))
        ref = _reference(x, coords)
        assert out.shape == (B, S, D)
        assert jnp.allclose(out, ref, atol=2e-5, rtol=2e-5), f"mismatch at {(B, S, D)}"

    # Small shapes consistent with the module: batch=2, seq=8, d_model=32
    run_case(2, 8, 32, jax.random.fold_in(key, 0))    # folded lane-dense path (k=4, DF=128)
    run_case(2, 16, 128, jax.random.fold_in(key, 1))  # D already a multiple of 128 (k=1)

    print("KERNEL_OK")
</pallas_src>

<mosaic_0001>
module attributes {stable_mosaic.version = 11 : i64} {
  func.func @kernel(%arg0: i32, %arg1: i32, %arg2: memref<4xf32, #tpu.memory_space<smem>>, %arg3: memref<1x2x128xf32, #tpu.memory_space<vmem>>, %arg4: memref<1x2x128xf32, #tpu.memory_space<vmem>>, %arg5: memref<2x128xf32, #tpu.memory_space<vmem>>, %arg6: memref<3x128xf32, #tpu.memory_space<vmem>>) attributes {dimension_semantics = [#tpu.dimension_semantics<parallel>, #tpu.dimension_semantics<arbitrary>], iteration_bounds = array<i64: 1, 2>, scalar_prefetch = 0 : i64, scratch_operands = 2 : i64, tpu.core_type = #tpu.core_type<tc>, window_params = [{transform_indices = @transform_0, window_bounds = array<i64: 4>}, {transform_indices = @transform_1, window_bounds = array<i64: 1, 2, 128>}, {transform_indices = @transform_2, window_bounds = array<i64: 1, 2, 128>}]} {
    %c0_i32 = arith.constant 0 : i32
    %0 = arith.cmpi eq, %arg1, %c0_i32 : i32
    %1 = arith.extui %0 : i1 to i32
    %c0_i32_0 = arith.constant 0 : i32
    %2 = arith.cmpi ne, %1, %c0_i32_0 : i32
    scf.if %2 {
      %32 = tpu.iota {dimensions = array<i32: 1>} : vector<2x128xi32>
      %33 = tpu.iota {dimensions = array<i32: 0>} : vector<2x128xi32>
      %c31_i32 = arith.constant 31 : i32
      %34 = vector.broadcast %c31_i32 : i32 to vector<2x128xi32>
      %35 = arith.andi %32, %34 : vector<2x128xi32>
      %c2_i32_14 = arith.constant 2 : i32
      %36 = arith.muli %arg0, %c2_i32_14 : i32
      %37 = vector.broadcast %36 : i32 to vector<2x128xi32>
      %38 = arith.addi %37, %33 : vector<2x128xi32>
      %c4_i32 = arith.constant 4 : i32
      %39 = vector.broadcast %c4_i32 : i32 to vector<2x128xi32>
      %40 = arith.muli %38, %39 : vector<2x128xi32>
      %c5_i32 = arith.constant 5 : i32
      %41 = vector.broadcast %c5_i32 : i32 to vector<2x128xi32>
      %42 = arith.shrsi %32, %41 : vector<2x128xi32>
      %43 = arith.addi %40, %42 : vector<2x128xi32>
      %44 = arith.sitofp %43 : vector<2x128xi32> to vector<2x128xf32>
      %c3_i32 = arith.constant 3 : i32
      %45 = vector.broadcast %c3_i32 : i32 to vector<2x128xi32>
      %46 = arith.andi %35, %45 : vector<2x128xi32>
      %47 = arith.subi %35, %46 : vector<2x128xi32>
      %48 = arith.sitofp %47 : vector<2x128xi32> to vector<2x128xf32>
      %cst_15 = arith.constant -0.287823141 : f32
      %49 = vector.broadcast %cst_15 : f32 to vector<2x128xf32>
      %50 = arith.mulf %48, %49 : vector<2x128xf32>
      %51 = math.exp %50 : vector<2x128xf32>
      %52 = arith.mulf %44, %51 : vector<2x128xf32>
      %c0_i32_16 = arith.constant 0 : i32
      %53 = vector.broadcast %c0_i32_16 : i32 to vector<2x128xi32>
      %54 = arith.cmpi eq, %46, %53 : vector<2x128xi32>
      %55 = math.sin %52 : vector<2x128xf32>
      %c1_i32_17 = arith.constant 1 : i32
      %56 = vector.broadcast %c1_i32_17 : i32 to vector<2x128xi32>
      %57 = arith.cmpi eq, %46, %56 : vector<2x128xi32>
      %58 = math.cos %52 : vector<2x128xf32>
      %cst_18 = arith.constant 0.000000e+00 : f32
      %59 = vector.broadcast %cst_18 : f32 to vector<2x128xf32>
      %60 = arith.select %57, %58, %59 : vector<2x128xi1>, vector<2x128xf32>
      %61 = arith.select %54, %55, %60 : vector<2x128xi1>, vector<2x128xf32>
      %c0_19 = arith.constant 0 : index
      %c0_20 = arith.constant 0 : index
      %62 = vector.load %arg5[%c0_19, %c0_20] : memref<2x128xf32, #tpu.memory_space<vmem>>, vector<2x128xf32>
      tpu.vector_store %arg5[%c0_19, %c0_20], %61 {strides = array<i32>} : memref<2x128xf32, #tpu.memory_space<vmem>>, vector<2x128xf32>,
      %63 = tpu.iota {dimensions = array<i32: 1>} : vector<1x128xi32>
      %c31_i32_21 = arith.constant 31 : i32
      %64 = vector.broadcast %c31_i32_21 : i32 to vector<1x128xi32>
      %65 = arith.andi %63, %64 : vector<1x128xi32>
      %c3_i32_22 = arith.constant 3 : i32
      %66 = vector.broadcast %c3_i32_22 : i32 to vector<1x128xi32>
      %67 = arith.andi %65, %66 : vector<1x128xi32>
      %68 = arith.subi %65, %67 : vector<1x128xi32>
      %69 = arith.sitofp %68 : vector<1x128xi32> to vector<1x128xf32>
      %cst_23 = arith.constant -0.287823141 : f32
      %70 = vector.broadcast %cst_23 : f32 to vector<1x128xf32>
      %71 = arith.mulf %69, %70 : vector<1x128xf32>
      %72 = math.exp %71 : vector<1x128xf32>
      %c2_i32_24 = arith.constant 2 : i32
      %73 = vector.broadcast %c2_i32_24 : i32 to vector<1x128xi32>
      %74 = arith.cmpi eq, %67, %73 : vector<1x128xi32>
      %cst_25 = arith.constant 0.000000e+00 : f32
      %75 = vector.broadcast %cst_25 : f32 to vector<1x128xf32>
      %76 = arith.select %74, %72, %75 : vector<1x128xi1>, vector<1x128xf32>
      %c0_26 = arith.constant 0 : index
      %c0_27 = arith.constant 0 : index
      %77 = vector.load %arg6[%c0_26, %c0_27] : memref<3x128xf32, #tpu.memory_space<vmem>>, vector<1x128xf32>
      tpu.vector_store %arg6[%c0_26, %c0_27], %76 {strides = array<i32>} : memref<3x128xf32, #tpu.memory_space<vmem>>, vector<1x128xf32>,
      %c3_i32_28 = arith.constant 3 : i32
      %78 = vector.broadcast %c3_i32_28 : i32 to vector<1x128xi32>
      %79 = arith.cmpi eq, %67, %78 : vector<1x128xi32>
      %cst_29 = arith.constant 0.000000e+00 : f32
      %80 = vector.broadcast %cst_29 : f32 to vector<1x128xf32>
      %81 = arith.select %79, %72, %80 : vector<1x128xi1>, vector<1x128xf32>
      %c1_30 = arith.constant 1 : index
      %c0_31 = arith.constant 0 : index
      %82 = vector.load %arg6[%c1_30, %c0_31] : memref<3x128xf32, #tpu.memory_space<vmem>>, vector<1x128xf32>
      tpu.vector_store %arg6[%c1_30, %c0_31], %81 {strides = array<i32>} : memref<3x128xf32, #tpu.memory_space<vmem>>, vector<1x128xf32>,
      %c3_i32_32 = arith.constant 3 : i32
      %83 = vector.broadcast %c3_i32_32 : i32 to vector<1x128xi32>
      %84 = arith.cmpi eq, %67, %83 : vector<1x128xi32>
      %cst_33 = arith.constant 1.000000e+00 : f32
      %cst_34 = arith.constant 0.000000e+00 : f32
      %85 = vector.broadcast %cst_33 : f32 to vector<1x128xf32>
      %86 = vector.broadcast %cst_34 : f32 to vector<1x128xf32>
      %87 = arith.select %84, %85, %86 : vector<1x128xi1>, vector<1x128xf32>
      %c2_35 = arith.constant 2 : index
      %c0_36 = arith.constant 0 : index
      %88 = vector.load %arg6[%c2_35, %c0_36] : memref<3x128xf32, #tpu.memory_space<vmem>>, vector<1x128xf32>
      tpu.vector_store %arg6[%c2_35, %c0_36], %87 {strides = array<i32>} : memref<3x128xf32, #tpu.memory_space<vmem>>, vector<1x128xf32>,
    } else {
    }
    %c2_i32 = arith.constant 2 : i32
    %3 = arith.muli %c2_i32, %arg1 : i32
    %4 = arith.index_cast %3 : i32 to index
    %5 = memref.load %arg2[%4] : memref<4xf32, #tpu.memory_space<smem>>
    %cst = arith.constant 0.0174532924 : f32
    %6 = arith.mulf %5, %cst : f32
    %c2_i32_1 = arith.constant 2 : i32
    %7 = arith.muli %c2_i32_1, %arg1 : i32
    %c1_i32 = arith.constant 1 : i32
    %8 = arith.addi %7, %c1_i32 : i32
    %9 = arith.index_cast %8 : i32 to index
    %10 = memref.load %arg2[%9] : memref<4xf32, #tpu.memory_space<smem>>
    %cst_2 = arith.constant 0.0174532924 : f32
    %11 = arith.mulf %10, %cst_2 : f32
    %c0 = arith.constant 0 : index
    %c0_3 = arith.constant 0 : index
    %12 = vector.load %arg6[%c0, %c0_3] : memref<3x128xf32, #tpu.memory_space<vmem>>, vector<1x128xf32>
    %13 = vector.broadcast %6 : f32 to vector<1x128xf32>
    %14 = arith.mulf %13, %12 : vector<1x128xf32>
    %15 = math.sin %14 : vector<1x128xf32>
    %c2 = arith.constant 2 : index
    %c0_4 = arith.constant 0 : index
    %16 = vector.load %arg6[%c2, %c0_4] : memref<3x128xf32, #tpu.memory_space<vmem>>, vector<1x128xf32>
    %c1 = arith.constant 1 : index
    %c0_5 = arith.constant 0 : index
    %17 = vector.load %arg6[%c1, %c0_5] : memref<3x128xf32, #tpu.memory_space<vmem>>, vector<1x128xf32>
    %18 = vector.broadcast %11 : f32 to vector<1x128xf32>
    %19 = arith.mulf %18, %17 : vector<1x128xf32>
    %20 = math.cos %19 : vector<1x128xf32>
    %21 = arith.mulf %16, %20 : vector<1x128xf32>
    %22 = arith.addf %15, %21 : vector<1x128xf32>
    %c0_6 = arith.constant 0 : index
    %c0_7 = arith.constant 0 : index
    %c0_8 = arith.constant 0 : index
    %23 = vector.load %arg3[%c0_6, %c0_7, %c0_8] : memref<1x2x128xf32, #tpu.memory_space<vmem>>, vector<1x2x128xf32>
    %24 = vector.shape_cast %23 : vector<1x2x128xf32> to vector<2x128xf32>
    %c0_9 = arith.constant 0 : index
    %c0_10 = arith.constant 0 : index
    %25 = vector.load %arg5[%c0_9, %c0_10] : memref<2x128xf32, #tpu.memory_space<vmem>>, vector<2x128xf32>
    %26 = arith.addf %24, %25 : vector<2x128xf32>
    %27 = vector.broadcast %22 : vector<1x128xf32> to vector<2x128xf32>
    %28 = arith.addf %26, %27 : vector<2x128xf32>
    %c0_11 = arith.constant 0 : index
    %c0_12 = arith.constant 0 : index
    %c0_13 = arith.constant 0 : index
    %29 = vector.load %arg4[%c0_11, %c0_12, %c0_13] : memref<1x2x128xf32, #tpu.memory_space<vmem>>, vector<1x2x128xf32>
    %30 = vector.shape_cast %29 : vector<1x2x128xf32> to vector<2x128xf32>
    %31 = vector.shape_cast %28 : vector<2x128xf32> to vector<1x2x128xf32>
    tpu.vector_store %arg4[%c0_11, %c0_12, %c0_13], %31 {strides = array<i32>} : memref<1x2x128xf32, #tpu.memory_space<vmem>>, vector<1x2x128xf32>,
    return
  }
  func.func @transform_0(%arg0: i32, %arg1: i32) -> i32 {
    %c0_i32 = arith.constant 0 : i32
    %c0_i32_0 = arith.constant 0 : i32
    return %c0_i32 : i32
  }
  func.func @transform_1(%arg0: i32, %arg1: i32) -> (i32, i32, i32) {
    %c0_i32 = arith.constant 0 : i32
    %c0_i32_0 = arith.constant 0 : i32
    return %arg1, %arg0, %c0_i32 : i32, i32, i32
  }
  func.func @transform_2(%arg0: i32, %arg1: i32) -> (i32, i32, i32) {
    %c0_i32 = arith.constant 0 : i32
    %c0_i32_0 = arith.constant 0 : i32
    return %arg1, %arg0, %c0_i32 : i32, i32, i32
  }
}

</mosaic_0001>

<llo_original>
// kernel: tpu_custom_call.1
$region0: #{tpu_custom_call.1}
  #allocation0 [shape = 'u32[]', space=smem, size = 0x4, offset = 0x4, fixed_abs, tag = 'smem constant byte address 0x4 - core index']
  #allocation1 [shape = 'u32[144,128]{1,0:T(1,128)}', space=vmem, size = 0x12000, scoped, tag = 'internal scratch']
  #allocation2 [shape = 'f32[2,128]{1,0:T(2,128)}', space=vmem, size = 0x400, scoped, tag = 'scratch operand']
  #allocation3 [shape = 'f32[3,128]{1,0:T(4,128)}', space=vmem, size = 0x800, scoped, tag = 'scratch operand']
  %s0 = inlined_call_operand.hbm [shape: f32[4], index: 0, kind: input, shape index: {}]
  %s1 = inlined_call_operand.hbm [shape: f32[2,2,128], index: 1, kind: input, shape index: {}]
  %s2 = inlined_call_operand.hbm [shape: f32[2,2,128], index: 2, kind: output, shape index: {}]
  %s3 = sld [smem:[#allocation0]]
  $region53: #{tpu_custom_call.1} parent=0
    _
  %s5 = ssub.s32 1, %s3
  %s6 = scalar_select 0, %s5, %s3
  $region1: #{tpu_custom_call.1} parent=0
    #allocation4 [shape = 'u8[512]{0}', space=smem, size = 0x200, scoped, tag = 'input window, operand 0, single buffered']
    #allocation5 [shape = 's32[2]{0}', space=sflag, size = 0x8, scoped, tag = 'scoped memory for tpu_custom_call.1']
    #allocation6 [shape = 's32[2]{0}', space=sflag, size = 0x8, scoped, tag = 'scoped memory for tpu_custom_call.1']
    #allocation7 [shape = 's32[2]{0}', space=sflag, size = 0x8, scoped, tag = 'scoped memory for tpu_custom_call.1']
    #allocation8 [shape = 'u8[2048]{0}', space=vmem, size = 0x800, scoped, tag = 'input window, operand 1']
    #allocation9 [shape = 'u8[2048]{0}', space=vmem, size = 0x800, scoped, tag = 'output window, operand 0']
    %7 = vsyncpa [#allocation7], 0
    %8 = vsyncpa [#allocation5], 0
    %s9 = scalar_lea.sflag [#allocation5], 1
    %10 = vsyncpa %s9, 0
    %11 = vsyncpa [#allocation6], 0
    %s12 = scalar_lea.sflag [#allocation6], 1
    %13 = vsyncpa %s12, 0
    loop: start=0, step=1, limit=4
    $region2: #{tpu_custom_call.1} parent=1 // loop_pre_header
      _
    $region3: #{tpu_custom_call.1} parent=1 // loop_header
      %s15 = sphi 0, %s19
      %p16 = scmp.ge.s32.totalorder %s15, 4
      %s22 = sphi 0, %s34
      %s23 = sphi 0, %s30
      %s24 = sphi 0, %s22
      %s25 = sphi 0, %s23
      %s26 = sphi 0, %s24
      %s27 = sphi 0, %s25
      %s35 = sphi 0, %s35
      %s37 = sphi 0, %s35
      %s38 = sphi 0, %s37
      %s52 = sphi 0, %s38
      %s60 = sphi 0, %s62
      %s63 = sphi 0, %s60
      %s64 = sphi 0, %s63
      %s80 = sphi 0, %s64
      %s88 = sphi 0, %s90
      %s91 = sphi 0, %s88
      %s92 = sphi 0, %s91
      %s108 = sphi 0, %s92
    $region4: #{tpu_custom_call.1} parent=1 // loop_header_branch
      %18 = sbr.rel (%p16) target = $region8
    $region5: #{tpu_custom_call.1} parent=1 // loop_body
      %s20 = ssub.s32 %s15, 1
      %s21 = ssub.s32 %s15, 2
      %s28 = sadd.s32 1, %s23
      %p29 = scmp.ge.s32.totalorder %s28, 2
      %s30 = scalar_select %p29, 0, %s28
      %s31 = sadd.s32 1, %s22
      %s32 = scalar_select %p29, %s31, %s22
      %p33 = scmp.ge.s32.totalorder %s32, 1
      %s34 = scalar_select %p33, 0, %s32
      %s36 = sadd.s32 %s35, 1
      %p39 = scmp.eq.s32.totalorder %s15, 1
      %p40 = scmp.ne.s32.totalorder %s35, %s37
      %p41 = scmp.eq.s32.totalorder %s15, 0
      %p42 = por %p40, %p41
      %p43 = scmp.ne.s32.totalorder %s35, %s37
      %p44 = scmp.eq.s32.totalorder %s20, 1
      %p45 = por %p43, %p44
      %p46 = scmp.ne.s32.totalorder %s37, %s38
      %p47 = scmp.eq.s32.totalorder %s20, 0
      %p48 = por %p46, %p47
      %p49 = scmp.ne.s32.totalorder %s37, %s38
      %p50 = scmp.eq.s32.totalorder %s21, 1
      %p51 = por %p49, %p50
      %p53 = scmp.ne.s32.totalorder %s38, %s52
      %p54 = scmp.eq.s32.totalorder %s21, 0
      %p55 = por %p53, %p54
      %s56 = ssub.s32 %s23, %s30
      %s57 = ssub.s32 %s22, %s34
      %s58 = sor.u32 %s56, %s57
      %p59 = scmp.eq.s32.totalorder %s58, 0
      %s61 = sadd.s32 %s60, 1
      %s62 = scalar_select %p59, %s60, %s61
      %p65 = pneg %p59
      %p66 = scmp.eq.s32.totalorder %s15, 1
      %p67 = por %p65, %p66
      %p68 = scmp.ne.s32.totalorder %s60, %s63
      %p69 = scmp.eq.s32.totalorder %s15, 0
      %p70 = por %p68, %p69
      %p71 = scmp.ne.s32.totalorder %s60, %s63
      %p72 = scmp.eq.s32.totalorder %s20, 1
      %p73 = por %p71, %p72
      %p74 = scmp.ne.s32.totalorder %s63, %s64
      %p75 = scmp.eq.s32.totalorder %s20, 0
      %p76 = por %p74, %p75
      %p77 = scmp.ne.s32.totalorder %s63, %s64
      %p78 = scmp.eq.s32.totalorder %s21, 1
      %p79 = por %p77, %p78
      %p81 = scmp.ne.s32.totalorder %s64, %s80
      %p82 = scmp.eq.s32.totalorder %s21, 0
      %p83 = por %p81, %p82
      %s84 = ssub.s32 %s23, %s30
      %s85 = ssub.s32 %s22, %s34
      %s86 = sor.u32 %s84, %s85
      %p87 = scmp.eq.s32.totalorder %s86, 0
      %s89 = sadd.s32 %s88, 1
      %s90 = scalar_select %p87, %s88, %s89
      %p93 = pneg %p87
      %p94 = scmp.eq.s32.totalorder %s15, 1
      %p95 = por %p93, %p94
      %p96 = scmp.ne.s32.totalorder %s88, %s91
      %p97 = scmp.eq.s32.totalorder %s15, 0
      %p98 = por %p96, %p97
      %p99 = scmp.ne.s32.totalorder %s88, %s91
      %p100 = scmp.eq.s32.totalorder %s20, 1
      %p101 = por %p99, %p100
      %p102 = scmp.ne.s32.totalorder %s91, %s92
      %p103 = scmp.eq.s32.totalorder %s20, 0
      %p104 = por %p102, %p103
      %p105 = scmp.ne.s32.totalorder %s91, %s92
      %p106 = scmp.eq.s32.totalorder %s21, 1
      %p107 = por %p105, %p106
      %p109 = scmp.ne.s32.totalorder %s92, %s108
      %p110 = scmp.eq.s32.totalorder %s21, 0
      %p111 = por %p109, %p110
      %p112 = scmp.le.s32.totalorder 1, %s15
      %p113 = scmp.lt.s32.totalorder %s15, 3
      %p114 = pnand %p112, %p113
      %p115 = pneg %p114
      // Predicated region
      $region9: #{tpu_custom_call.1} parent=5 // pred_check
        _
      $region10: #{tpu_custom_call.1} parent=5 // pred_check_branch
        %117 = sbr.rel (%p114) target = $region12
      $region11: #{tpu_custom_call.1} parent=5 // pred_region
        %s118 = ssub.s32 %s15, 1
        // Predicated region
        $region13: #{tpu_custom_call.1} parent=11 // pred_check
          %p119 = pneg %p48
        $region14: #{tpu_custom_call.1} parent=11 // pred_check_branch
          %121 = sbr.rel (%p119) target = $region16
        $region15: #{tpu_custom_call.1} parent=11 // pred_region
          %s123 = ssub.s32 16, 16
          %124 = vsyncadd [#allocation7], %s123
          %127 = dma.hbm_to_smem %s0, 16, [#allocation4], [#allocation7]
        $region16: #{tpu_custom_call.1} parent=11 // pred_fallthru
          _
      $region12: #{tpu_custom_call.1} parent=5 // pred_fallthru
        _
      %p128 = scmp.lt.s32.totalorder %s15, 2
      // Predicated region
      $region17: #{tpu_custom_call.1} parent=5 // pred_check
        %p129 = pneg %p128
      $region18: #{tpu_custom_call.1} parent=5 // pred_check_branch
        %131 = sbr.rel (%p129) target = $region20
      $region19: #{tpu_custom_call.1} parent=5 // pred_region
        // Predicated region
        $region21: #{tpu_custom_call.1} parent=19 // pred_check
          %p132 = pneg %p70
        $region22: #{tpu_custom_call.1} parent=19 // pred_check_branch
          %134 = sbr.rel (%p132) target = $region24
        $region23: #{tpu_custom_call.1} parent=19 // pred_region
          %s135 = sand.u32 %s60, 1
          %s136 = scalar_lea.sflag [#allocation5], %s135
          %s137 = sand.u32 %s60, 1
          %s138 = smul.addr %s137, 2
          %s139 = scalar_lea.vmem [#allocation8], %s138
          %s141 = ssub.s32 32, 32
          %142 = vsyncadd %s136, %s141
          %s143 = sadd.s32 %s22, %s23
          %s144 = smul.addr %s143, 32
          %s145 = scalar_lea.hbm %s1, %s144
          %s147 = sshll.u32 %s139, 4
          %s148 = int_to_ptr.vmem [resolvable:$true] %s147
          %150 = dma.hbm_to_vmem [thread:$0]  %s145, 32, %s148, %s136
        $region24: #{tpu_custom_call.1} parent=19 // pred_fallthru
          _
      $region20: #{tpu_custom_call.1} parent=5 // pred_fallthru
        _
      %p151 = scmp.le.s32.totalorder 1, %s15
      %p152 = scmp.lt.s32.totalorder %s15, 3
      %p153 = pnand %p151, %p152
      %p154 = pneg %p153
      // Predicated region
      $region25: #{tpu_custom_call.1} parent=5 // pred_check
        _
      $region26: #{tpu_custom_call.1} parent=5 // pred_check_branch
        %156 = sbr.rel (%p153) target = $region28
      $region27: #{tpu_custom_call.1} parent=5 // pred_region
        %s157 = ssub.s32 %s15, 1
        // Predicated region
        $region29: #{tpu_custom_call.1} parent=27 // pred_check
          %p158 = pneg %p48
        $region30: #{tpu_custom_call.1} parent=27 // pred_check_branch
          %160 = sbr.rel (%p158) target = $region32
        $region31: #{tpu_custom_call.1} parent=27 // pred_region
          %161 = dma.done [#allocation7], 16
        $region32: #{tpu_custom_call.1} parent=27 // pred_fallthru
          _
        %s162 = sand.u32 %s63, 1
        %s163 = scalar_lea.sflag [#allocation5], %s162
        %s164 = sand.u32 %s63, 1
        %s165 = smul.addr %s164, 2
        %s166 = scalar_lea.vmem [#allocation8], %s165
        // Predicated region
        $region33: #{tpu_custom_call.1} parent=27 // pred_check
          %p167 = pneg %p76
        $region34: #{tpu_custom_call.1} parent=27 // pred_check_branch
          %169 = sbr.rel (%p167) target = $region36
        $region35: #{tpu_custom_call.1} parent=27 // pred_region
          %170 = dma.done %s163, 32
        $region36: #{tpu_custom_call.1} parent=27 // pred_fallthru
          _
        %171 = sfence
        %p172 = pneg %p48
        %p173 = pneg %p45
        %s174 = sand.u32 %s63, 1
        %s175 = scalar_lea.sflag [#allocation5], %s174
        %s176 = sand.u32 %s63, 1
        %s177 = smul.addr %s176, 2
        %s178 = scalar_lea.vmem [#allocation8], %s177
        %p179 = pneg %p76
        %p180 = pneg %p73
        %p181 = pneg %p104
        %p182 = pneg %p101
        %s183 = sand.u32 %s91, 1
        %s184 = scalar_lea.sflag [#allocation6], %s183
        %s185 = sand.u32 %s91, 1
        %s186 = smul.addr %s185, 2
        %s187 = scalar_lea.vmem [#allocation9], %s186
        %p188 = scmp.eq.s32.totalorder %s25, 0
        // Predicated region
        $region37: #{tpu_custom_call.1} parent=27 // pred_check
          %p189 = pneg %p188
        $region38: #{tpu_custom_call.1} parent=27 // pred_check_branch
          %191 = sbr.rel (%p189) target = $region40
        $region39: #{tpu_custom_call.1} parent=27 // pred_region
          %v192 = vlaneseq
          %v193 = vand.u32 %v192, 127
          %v194 = vlaneseq
          %v195 = vshrl.u32 %v194, 7
          %v196 = vand.u32 %v193, 31
          %s197 = smul.u32 %s24, 2
          %v198 = vstv %s197
          %v199 = vadd.s32 %v198, %v195
          %v200 = vmul.u32 %v199, 4
          %v201 = vshra.s32 %v193, 5
          %v202 = vadd.s32 %v200, %v201
          %v203 = vcvt.s32.f32 %v202
          %v204 = vand.u32 %v196, 3
          %v205 = vsub.s32 %v196, %v204
          %v206 = vcvt.s32.f32 %v205
          %v207 = vmul.f32 %v206, -0.28782314
          %v208 = vmul.f32 %v207, 1.442695
          %v209 = vpow.pop %v208
          %v210 = vmul.f32 %v203, %v209
          %vm211 = vcmp.eq.s32.totalorder %v204, 0
          %v212 = vand.u32 2147483647, %v210
          %vm213 = vcmp.le.f32.partialorder %v212, 0.7853982
          %vm214 = vcmp.lt.s32.totalorder %v210, 0
          %v215 = vand.u32 %v210, 2139095040
          %v216 = vshrl.u32 %v215, 23
          %v217 = vsub.s32 %v216, 127
          %v218 = vand.u32 2147483647, %v210
          %v219 = vand.u32 %v218, 8388607
          %v220 = vor.u32 %v219, 8388608
          %v221 = vsub.s32 0, %v220
          %v222 = vadd.s32 %v217, 1
          %vm223 = vcmp.gt.s32.totalorder %v222, 0
          %v224 = vsel %vm223, %v222, 0
          %v225 = vshrl.u32 %v224, 5
          %v226 = vand.u32 %v224, 31
          %v227 = vsub.s32 32, %v226
          %v228 = vshrl.u32 683565275, %v227
          %v229 = vshll.u32 683565275, %v226
          %v230 = vshrl.u32 2475754826, %v227
          %v231 = vor.u32 %v229, %v230
          %v232 = vshll.u32 2475754826, %v226
          %v233 = vshrl.u32 2131351028, %v227
          %v234 = vor.u32 %v232, %v233
          %v235 = vshll.u32 2131351028, %v226
          %v236 = vshrl.u32 2102212464, %v227
          %v237 = vor.u32 %v235, %v236
          %v238 = vshll.u32 2102212464, %v226
          %v239 = vshrl.u32 920167782, %v227
          %v240 = vor.u32 %v238, %v239
          %v241 = vshll.u32 920167782, %v226
          %v242 = vshrl.u32 1326507024, %v227
          %v243 = vor.u32 %v241, %v242
          %vm244 = vcmp.lt.s32.totalorder %v225, 1
          %vm245 = vcmp.lt.s32.totalorder %v225, 2
          %vm246 = vcmp.lt.s32.totalorder %v225, 3
          %vm247 = vcmp.lt.s32.totalorder %v225, 4
          %v248 = vsel %vm244, %v228, %v231
          %v249 = vsel %vm247, %v237, 2102212464
          %v250 = vsel %vm246, %v234, %v249
          %v251 = vsel %vm245, %v248, %v250
          %v252 = vsel %vm244, %v231, %v234
          %v253 = vsel %vm247, %v240, 920167782
          %v254 = vsel %vm246, %v237, %v253
          %v255 = vsel %vm245, %v252, %v254
          %v256 = vsel %vm244, %v234, %v237
          %v257 = vsel %vm247, %v243, 1326507024
          %v258 = vsel %vm246, %v240, %v257
          %v259 = vsel %vm245, %v256, %v258
          %v260 = vshll.u32 %v220, 8
          %v261 = vmul.u32.u64.compose %v260, %v259
          %v262 = vextract.low.u32 %v261
          %v263 = vextract.high.u32 %v261
          %v264 = vmul.u32.u64.compose %v260, %v255
          %v265 = vextract.low.u32 %v264
          %v266 = vextract.high.u32 %v264
          %v267 = vmul.u32 %v260, %v251
          %v268 = vadd.s32 %v263, %v265
          %vm269 = vc.u32 %v263, %v265
          %v270 = vadd.s32 %v266, 1
          %v271 = vsel %vm269, %v270, %v266
          %v272 = vadd.s32 %v267, %v271
          %v273 = vadd.s32 %v272, 536870912
          %v274 = vshrl.u32 %v273, 30
          %v275 = vshll.u32 %v274, 30
          %v276 = vsub.s32 %v272, %v275
          %vm277 = vcmp.lt.s32.totalorder %v276, 0
          %v278 = vsub.s32 0, %v276
          %v279 = vsel %vm277, %v278, %v276
          %v280 = vclz %v279
          %v281 = vsub.s32 %v280, 2
          %vm282 = vcmp.gt.s32.totalorder 0, %v281
          %v283 = vsel %vm282, 0, %v281
          %v284 = vsub.s32 32, %v283
          %v285 = vshll.u32 %v276, %v283
          %v286 = vshrl.u32 %v268, %v284
          %v287 = vor.u32 %v285, %v286
          %v288 = vsub.s32 4294967266, %v283
          %v289 = vadd.s32 %v288, 127
          %v290 = vshll.u32 %v289, 23
          %v291 = vor.u32 4788187, %v290
          %v292 = vand.u32 2147483647, %v291
          %v294 = vcvt.s32.f32 %v287
          %v295 = vmul.f32 %v294, %v292
          %v296 = vxor.u32 %v295, 2147483648
          %v297 = vsel %vm214, %v296, %v295
          %v298 = vsub.s32 4, %v274
          %v299 = vsel %vm214, %v298, %v274
          %v300 = vsel %vm213, %v210, %v297
          %v301 = vsel %vm213, 0, %v299
          %v302 = vcosq.f32.pop %v300
          %v303 = vsinq.f32.pop %v300
          %vm304 = vweird.f32 %v210
          %v305 = vadd.s32 %v301, 3
          %v306 = vand.u32 %v305, 3
          %vm307 = vcmp.lt.s32.totalorder %v306, 2
          %vm308 = vcmp.eq.s32.totalorder %v306, 0
          %v309 = vxor.u32 %v303, 2147483648
          %v310 = vsel %vm308, %v302, %v309
          %vm311 = vcmp.eq.s32.totalorder %v306, 2
          %v312 = vxor.u32 %v302, 2147483648
          %v313 = vsel %vm311, %v312, %v303
          %v314 = vsel %vm307, %v310, %v313
          %v315 = vsel %vm304, nan, %v314
          %vm316 = vcmp.eq.s32.totalorder %v204, 1
          %v317 = vand.u32 2147483647, %v210
          %vm318 = vcmp.le.f32.partialorder %v317, 0.7853982
          %vm319 = vcmp.lt.s32.totalorder %v210, 0
          %v320 = vand.u32 %v210, 2139095040
          %v321 = vshrl.u32 %v320, 23
          %v322 = vsub.s32 %v321, 127
          %v323 = vand.u32 2147483647, %v210
          %v324 = vand.u32 %v323, 8388607
          %v325 = vor.u32 %v324, 8388608
          %v326 = vsub.s32 0, %v325
          %v327 = vadd.s32 %v322, 1
          %vm328 = vcmp.gt.s32.totalorder %v327, 0
          %v329 = vsel %vm328, %v327, 0
          %v330 = vshrl.u32 %v329, 5
          %v331 = vand.u32 %v329, 31
          %v332 = vsub.s32 32, %v331
          %v333 = vshrl.u32 683565275, %v332
          %v334 = vshll.u32 683565275, %v331
          %v335 = vshrl.u32 2475754826, %v332
          %v336 = vor.u32 %v334, %v335
          %v337 = vshll.u32 2475754826, %v331
          %v338 = vshrl.u32 2131351028, %v332
          %v339 = vor.u32 %v337, %v338
          %v340 = vshll.u32 2131351028, %v331
          %v341 = vshrl.u32 2102212464, %v332
          %v342 = vor.u32 %v340, %v341
          %v343 = vshll.u32 2102212464, %v331
          %v344 = vshrl.u32 920167782, %v332
          %v345 = vor.u32 %v343, %v344
          %v346 = vshll.u32 920167782, %v331
          %v347 = vshrl.u32 1326507024, %v332
          %v348 = vor.u32 %v346, %v347
          %vm349 = vcmp.lt.s32.totalorder %v330, 1
          %vm350 = vcmp.lt.s32.totalorder %v330, 2
          %vm351 = vcmp.lt.s32.totalorder %v330, 3
          %vm352 = vcmp.lt.s32.totalorder %v330, 4
          %v353 = vsel %vm349, %v333, %v336
          %v354 = vsel %vm352, %v342, 2102212464
          %v355 = vsel %vm351, %v339, %v354
          %v356 = vsel %vm350, %v353, %v355
          %v357 = vsel %vm349, %v336, %v339
          %v358 = vsel %vm352, %v345, 920167782
          %v359 = vsel %vm351, %v342, %v358
          %v360 = vsel %vm350, %v357, %v359
          %v361 = vsel %vm349, %v339, %v342
          %v362 = vsel %vm352, %v348, 1326507024
          %v363 = vsel %vm351, %v345, %v362
          %v364 = vsel %vm350, %v361, %v363
          %v365 = vshll.u32 %v325, 8
          %v366 = vmul.u32.u64.compose %v365, %v364
          %v367 = vextract.low.u32 %v366
          %v368 = vextract.high.u32 %v366
          %v369 = vmul.u32.u64.compose %v365, %v360
          %v370 = vextract.low.u32 %v369
          %v371 = vextract.high.u32 %v369
          %v372 = vmul.u32 %v365, %v356
          %v373 = vadd.s32 %v368, %v370
          %vm374 = vc.u32 %v368, %v370
          %v375 = vadd.s32 %v371, 1
          %v376 = vsel %vm374, %v375, %v371
          %v377 = vadd.s32 %v372, %v376
          %v378 = vadd.s32 %v377, 536870912
          %v379 = vshrl.u32 %v378, 30
          %v380 = vshll.u32 %v379, 30
          %v381 = vsub.s32 %v377, %v380
          %vm382 = vcmp.lt.s32.totalorder %v381, 0
          %v383 = vsub.s32 0, %v381
          %v384 = vsel %vm382, %v383, %v381
          %v385 = vclz %v384
          %v386 = vsub.s32 %v385, 2
          %vm387 = vcmp.gt.s32.totalorder 0, %v386
          %v388 = vsel %vm387, 0, %v386
          %v389 = vsub.s32 32, %v388
          %v390 = vshll.u32 %v381, %v388
          %v391 = vshrl.u32 %v373, %v389
          %v392 = vor.u32 %v390, %v391
          %v393 = vsub.s32 4294967266, %v388
          %v394 = vadd.s32 %v393, 127
          %v395 = vshll.u32 %v394, 23
          %v396 = vor.u32 4788187, %v395
          %v397 = vand.u32 2147483647, %v396
          %v399 = vcvt.s32.f32 %v392
          %v400 = vmul.f32 %v399, %v397
          %v401 = vxor.u32 %v400, 2147483648
          %v402 = vsel %vm319, %v401, %v400
          %v403 = vsub.s32 4, %v379
          %v404 = vsel %vm319, %v403, %v379
          %v405 = vsel %vm318, %v210, %v402
          %v406 = vsel %vm318, 0, %v404
          %v407 = vcosq.f32.pop %v405
          %v408 = vsinq.f32.pop %v405
          %vm409 = vweird.f32 %v210
          %v410 = vand.u32 %v406, 3
          %vm411 = vcmp.lt.s32.totalorder %v410, 2
          %vm412 = vcmp.eq.s32.totalorder %v410, 0
          %v413 = vxor.u32 %v408, 2147483648
          %v414 = vsel %vm412, %v407, %v413
          %vm415 = vcmp.eq.s32.totalorder %v410, 2
          %v416 = vxor.u32 %v407, 2147483648
          %v417 = vsel %vm415, %v416, %v408
          %v418 = vsel %vm411, %v414, %v417
          %v419 = vsel %vm409, nan, %v418
          %v420 = vsel %vm316, %v419, 0.0
          %v421 = vsel %vm211, %v315, %v420
          %422 = vst [vmem:[#allocation2] sm:$0x3] %v421
          %vm423 = vcmp.eq.s32.totalorder %v204, 2
          %v424 = vsel %vm423, %v209, 0.0
          %425 = vst [vmem:[#allocation3] sm:$0x1] %v424
          %vm426 = vcmp.eq.s32.totalorder %v204, 3
          %v427 = vsel %vm426, %v209, 0.0
          %428 = vst [vmem:[#allocation3 + $0x1] sm:$0x1] %v427
          %v429 = vsel %vm426, 1.0, 0.0
          %430 = vst [vmem:[#allocation3 + $0x2] sm:$0x1] %v429
        $region40: #{tpu_custom_call.1} parent=27 // pred_fallthru
          _
        %s431 = smul.u32 %s25, 2
        %s432 = sld [smem:[#allocation4 + %s431]]
        %s433 = smul.f32 %s432, 0.017453292
        %s434 = sadd.s32 %s431, 1
        %s435 = sld [smem:[#allocation4 + %s434]]
        %s436 = smul.f32 %s435, 0.017453292
        %v437 = vld [vmem:[#allocation3] sm:$0x1]
        %v438 = vstv %s433
        %v439 = vmul.f32 %v438, %v437
        %v440 = vand.u32 2147483647, %v439
        %vm441 = vcmp.le.f32.partialorder %v440, 0.7853982
        %vm442 = vcmp.lt.s32.totalorder %v439, 0
        %v443 = vand.u32 %v439, 2139095040
        %v444 = vshrl.u32 %v443, 23
        %v445 = vsub.s32 %v444, 127
        %v446 = vand.u32 2147483647, %v439
        %v447 = vand.u32 %v446, 8388607
        %v448 = vor.u32 %v447, 8388608
        %v449 = vsub.s32 0, %v448
        %v450 = vadd.s32 %v445, 1
        %vm451 = vcmp.gt.s32.totalorder %v450, 0
        %v452 = vsel %vm451, %v450, 0
        %v453 = vshrl.u32 %v452, 5
        %v454 = vand.u32 %v452, 31
        %v455 = vsub.s32 32, %v454
        %v456 = vshrl.u32 683565275, %v455
        %v457 = vshll.u32 683565275, %v454
        %v458 = vshrl.u32 2475754826, %v455
        %v459 = vor.u32 %v457, %v458
        %v460 = vshll.u32 2475754826, %v454
        %v461 = vshrl.u32 2131351028, %v455
        %v462 = vor.u32 %v460, %v461
        %v463 = vshll.u32 2131351028, %v454
        %v464 = vshrl.u32 2102212464, %v455
        %v465 = vor.u32 %v463, %v464
        %v466 = vshll.u32 2102212464, %v454
        %v467 = vshrl.u32 920167782, %v455
        %v468 = vor.u32 %v466, %v467
        %v469 = vshll.u32 920167782, %v454
        %v470 = vshrl.u32 1326507024, %v455
        %v471 = vor.u32 %v469, %v470
        %vm472 = vcmp.lt.s32.totalorder %v453, 1
        %vm473 = vcmp.lt.s32.totalorder %v453, 2
        %vm474 = vcmp.lt.s32.totalorder %v453, 3
        %vm475 = vcmp.lt.s32.totalorder %v453, 4
        %v476 = vsel %vm472, %v456, %v459
        %v477 = vsel %vm475, %v465, 2102212464
        %v478 = vsel %vm474, %v462, %v477
        %v479 = vsel %vm473, %v476, %v478
        %v480 = vsel %vm472, %v459, %v462
        %v481 = vsel %vm475, %v468, 920167782
        %v482 = vsel %vm474, %v465, %v481
        %v483 = vsel %vm473, %v480, %v482
        %v484 = vsel %vm472, %v462, %v465
        %v485 = vsel %vm475, %v471, 1326507024
        %v486 = vsel %vm474, %v468, %v485
        %v487 = vsel %vm473, %v484, %v486
        %v488 = vshll.u32 %v448, 8
        %v489 = vmul.u32.u64.compose %v488, %v487
        %v490 = vextract.low.u32 %v489
        %v491 = vextract.high.u32 %v489
        %v492 = vmul.u32.u64.compose %v488, %v483
        %v493 = vextract.low.u32 %v492
        %v494 = vextract.high.u32 %v492
        %v495 = vmul.u32 %v488, %v479
        %v496 = vadd.s32 %v491, %v493
        %vm497 = vc.u32 %v491, %v493
        %v498 = vadd.s32 %v494, 1
        %v499 = vsel %vm497, %v498, %v494
        %v500 = vadd.s32 %v495, %v499
        %v501 = vadd.s32 %v500, 536870912
        %v502 = vshrl.u32 %v501, 30
        %v503 = vshll.u32 %v502, 30
        %v504 = vsub.s32 %v500, %v503
        %vm505 = vcmp.lt.s32.totalorder %v504, 0
        %v506 = vsub.s32 0, %v504
        %v507 = vsel %vm505, %v506, %v504
        %v508 = vclz %v507
        %v509 = vsub.s32 %v508, 2
        %vm510 = vcmp.gt.s32.totalorder 0, %v509
        %v511 = vsel %vm510, 0, %v509
        %v512 = vsub.s32 32, %v511
        %v513 = vshll.u32 %v504, %v511
        %v514 = vshrl.u32 %v496, %v512
        %v515 = vor.u32 %v513, %v514
        %v516 = vsub.s32 4294967266, %v511
        %v517 = vadd.s32 %v516, 127
        %v518 = vshll.u32 %v517, 23
        %v519 = vor.u32 4788187, %v518
        %v520 = vand.u32 2147483647, %v519
        %v522 = vcvt.s32.f32 %v515
        %v523 = vmul.f32 %v522, %v520
        %v524 = vxor.u32 %v523, 2147483648
        %v525 = vsel %vm442, %v524, %v523
        %v526 = vsub.s32 4, %v502
        %v527 = vsel %vm442, %v526, %v502
        %v528 = vsel %vm441, %v439, %v525
        %v529 = vsel %vm441, 0, %v527
        %v530 = vcosq.f32.pop %v528
        %v531 = vsinq.f32.pop %v528
        %vm532 = vweird.f32 %v439
        %v533 = vadd.s32 %v529, 3
        %v534 = vand.u32 %v533, 3
        %vm535 = vcmp.lt.s32.totalorder %v534, 2
        %vm536 = vcmp.eq.s32.totalorder %v534, 0
        %v537 = vxor.u32 %v531, 2147483648
        %v538 = vsel %vm536, %v530, %v537
        %vm539 = vcmp.eq.s32.totalorder %v534, 2
        %v540 = vxor.u32 %v530, 2147483648
        %v541 = vsel %vm539, %v540, %v531
        %v542 = vsel %vm535, %v538, %v541
        %v543 = vsel %vm532, nan, %v542
        %v544 = vld [vmem:[#allocation3 + $0x2] sm:$0x1]
        %v545 = vld [vmem:[#allocation3 + $0x1] sm:$0x1]
        %v546 = vstv %s436
        %v547 = vmul.f32 %v546, %v545
        %v548 = vand.u32 2147483647, %v547
        %vm549 = vcmp.le.f32.partialorder %v548, 0.7853982
        %vm550 = vcmp.lt.s32.totalorder %v547, 0
        %v551 = vand.u32 %v547, 2139095040
        %v552 = vshrl.u32 %v551, 23
        %v553 = vsub.s32 %v552, 127
        %v554 = vand.u32 2147483647, %v547
        %v555 = vand.u32 %v554, 8388607
        %v556 = vor.u32 %v555, 8388608
        %v557 = vsub.s32 0, %v556
        %v558 = vadd.s32 %v553, 1
        %vm559 = vcmp.gt.s32.totalorder %v558, 0
        %v560 = vsel %vm559, %v558, 0
        %v561 = vshrl.u32 %v560, 5
        %v562 = vand.u32 %v560, 31
        %v563 = vsub.s32 32, %v562
        %v564 = vshrl.u32 683565275, %v563
        %v565 = vshll.u32 683565275, %v562
        %v566 = vshrl.u32 2475754826, %v563
        %v567 = vor.u32 %v565, %v566
        %v568 = vshll.u32 2475754826, %v562
        %v569 = vshrl.u32 2131351028, %v563
        %v570 = vor.u32 %v568, %v569
        %v571 = vshll.u32 2131351028, %v562
        %v572 = vshrl.u32 2102212464, %v563
        %v573 = vor.u32 %v571, %v572
        %v574 = vshll.u32 2102212464, %v562
        %v575 = vshrl.u32 920167782, %v563
        %v576 = vor.u32 %v574, %v575
        %v577 = vshll.u32 920167782, %v562
        %v578 = vshrl.u32 1326507024, %v563
        %v579 = vor.u32 %v577, %v578
        %vm580 = vcmp.lt.s32.totalorder %v561, 1
        %vm581 = vcmp.lt.s32.totalorder %v561, 2
        %vm582 = vcmp.lt.s32.totalorder %v561, 3
        %vm583 = vcmp.lt.s32.totalorder %v561, 4
        %v584 = vsel %vm580, %v564, %v567
        %v585 = vsel %vm583, %v573, 2102212464
        %v586 = vsel %vm582, %v570, %v585
        %v587 = vsel %vm581, %v584, %v586
        %v588 = vsel %vm580, %v567, %v570
        %v589 = vsel %vm583, %v576, 920167782
        %v590 = vsel %vm582, %v573, %v589
        %v591 = vsel %vm581, %v588, %v590
        %v592 = vsel %vm580, %v570, %v573
        %v593 = vsel %vm583, %v579, 1326507024
        %v594 = vsel %vm582, %v576, %v593
        %v595 = vsel %vm581, %v592, %v594
        %v596 = vshll.u32 %v556, 8
        %v597 = vmul.u32.u64.compose %v596, %v595
        %v598 = vextract.low.u32 %v597
        %v599 = vextract.high.u32 %v597
        %v600 = vmul.u32.u64.compose %v596, %v591
        %v601 = vextract.low.u32 %v600
        %v602 = vextract.high.u32 %v600
        %v603 = vmul.u32 %v596, %v587
        %v604 = vadd.s32 %v599, %v601
        %vm605 = vc.u32 %v599, %v601
        %v606 = vadd.s32 %v602, 1
        %v607 = vsel %vm605, %v606, %v602
        %v608 = vadd.s32 %v603, %v607
        %v609 = vadd.s32 %v608, 536870912
        %v610 = vshrl.u32 %v609, 30
        %v611 = vshll.u32 %v610, 30
        %v612 = vsub.s32 %v608, %v611
        %vm613 = vcmp.lt.s32.totalorder %v612, 0
        %v614 = vsub.s32 0, %v612
        %v615 = vsel %vm613, %v614, %v612
        %v616 = vclz %v615
        %v617 = vsub.s32 %v616, 2
        %vm618 = vcmp.gt.s32.totalorder 0, %v617
        %v619 = vsel %vm618, 0, %v617
        %v620 = vsub.s32 32, %v619
        %v621 = vshll.u32 %v612, %v619
        %v622 = vshrl.u32 %v604, %v620
        %v623 = vor.u32 %v621, %v622
        %v624 = vsub.s32 4294967266, %v619
        %v625 = vadd.s32 %v624, 127
        %v626 = vshll.u32 %v625, 23
        %v627 = vor.u32 4788187, %v626
        %v628 = vand.u32 2147483647, %v627
        %v630 = vcvt.s32.f32 %v623
        %v631 = vmul.f32 %v630, %v628
        %v632 = vxor.u32 %v631, 2147483648
        %v633 = vsel %vm550, %v632, %v631
        %v634 = vsub.s32 4, %v610
        %v635 = vsel %vm550, %v634, %v610
        %v636 = vsel %vm549, %v547, %v633
        %v637 = vsel %vm549, 0, %v635
        %v638 = vcosq.f32.pop %v636
        %v639 = vsinq.f32.pop %v636
        %vm640 = vweird.f32 %v547
        %v641 = vand.u32 %v637, 3
        %vm642 = vcmp.lt.s32.totalorder %v641, 2
        %vm643 = vcmp.eq.s32.totalorder %v641, 0
        %v644 = vxor.u32 %v639, 2147483648
        %v645 = vsel %vm643, %v638, %v644
        %vm646 = vcmp.eq.s32.totalorder %v641, 2
        %v647 = vxor.u32 %v638, 2147483648
        %v648 = vsel %vm646, %v647, %v639
        %v649 = vsel %vm642, %v645, %v648
        %v650 = vsel %vm640, nan, %v649
        %v651 = vmul.f32 %v544, %v650
        %v652 = vadd.f32 %v543, %v651
        %v653 = vld [vmem:[%s166] sm:$0x3]
        %v654 = vld [vmem:[#allocation2] sm:$0x3]
        %v655 = vadd.f32 %v653, %v654
        %v656 = vlaneseq
        %v657 = vshrl.u32 %v656, 7
        %v658 = vsub.s32 0, %v657
        %v659 = vrot.slane %v652, %v658
        %v660 = vadd.f32 %v655, %v659
        %661 = vst [vmem:[%s187] sm:$0x3] %v660
        %s662 = sand.u32 %s91, 1
        %s663 = scalar_lea.sflag [#allocation6], %s662
        %s664 = sand.u32 %s91, 1
        %s665 = smul.addr %s664, 2
        %s666 = scalar_lea.vmem [#allocation9], %s665
        // Predicated region
        $region41: #{tpu_custom_call.1} parent=27 // pred_check
          %p667 = pneg %p101
        $region42: #{tpu_custom_call.1} parent=27 // pred_check_branch
          %669 = sbr.rel (%p667) target = $region44
        $region43: #{tpu_custom_call.1} parent=27 // pred_region
          %s671 = ssub.s32 32, 32
          %672 = vsyncadd %s663, %s671
          %s673 = sadd.s32 %s24, %s25
          %s674 = smul.addr %s673, 32
          %s675 = scalar_lea.hbm %s2, %s674
          %s677 = sshll.u32 %s666, 4
          %s678 = int_to_ptr.vmem [resolvable:$true] %s677
          %680 = dma.vmem_to_hbm [thread:$0]  %s678, 32, %s675, %s663
        $region44: #{tpu_custom_call.1} parent=27 // pred_fallthru
          _
      $region28: #{tpu_custom_call.1} parent=5 // pred_fallthru
        _
      %p681 = scmp.le.s32.totalorder 2, %s15
      // Predicated region
      $region45: #{tpu_custom_call.1} parent=5 // pred_check
        %p682 = pneg %p681
      $region46: #{tpu_custom_call.1} parent=5 // pred_check_branch
        %684 = sbr.rel (%p682) target = $region48
      $region47: #{tpu_custom_call.1} parent=5 // pred_region
        %s685 = ssub.s32 %s15, 2
        // Predicated region
        $region49: #{tpu_custom_call.1} parent=47 // pred_check
          %p686 = pneg %p107
        $region50: #{tpu_custom_call.1} parent=47 // pred_check_branch
          %688 = sbr.rel (%p686) target = $region52
        $region51: #{tpu_custom_call.1} parent=47 // pred_region
          %s689 = sand.u32 %s92, 1
          %s690 = scalar_lea.sflag [#allocation6], %s689
          %s691 = sand.u32 %s92, 1
          %s692 = smul.addr %s691, 2
          %s693 = scalar_lea.vmem [#allocation9], %s692
          %694 = dma.done %s690, 32
        $region52: #{tpu_custom_call.1} parent=47 // pred_fallthru
          _
      $region48: #{tpu_custom_call.1} parent=5 // pred_fallthru
        _
    $region6: #{tpu_custom_call.1} parent=1 // loop_footer
      %s19 = sadd.s32 1, %s15
    $region7: #{tpu_custom_call.1} parent=1 // loop_footer_branch
      %14 = sbr.rel target = $region3
    $region8: #{tpu_custom_call.1} parent=1 // loop_exit
      _
    %695 = vsyncpa [#allocation5], 1
    %s696 = scalar_lea.sflag [#allocation5], 1
    %697 = vsyncpa %s696, 1
    %698 = vsyncpa [#allocation6], 1
    %s699 = scalar_lea.sflag [#allocation6], 1
    %700 = vsyncpa %s699, 1
    %701 = vsyncpa [#allocation7], 1
    %s702 = scalar_lea.sflag [#allocation7], 1
    %703 = vsyncpa %s702, 1

</llo_original>
